<compile_context>
chip_gen: v6e
topology: v6e:2x2x1
jax: 0.10.0
libtpu: 0.0.40
codegen_flags: <defaults>
</compile_context>

<pallas_src>
import math
import functools

import jax
import jax.numpy as jnp
from jax.experimental import pallas as pl
from jax.experimental.pallas import tpu as pltpu
import numpy as np


def _pe_dropout_kernel(seed_ref, x_ref, pe_ref, o_ref, *, p, training,
                       block_s, batch, d_model):
    # x_ref : [tS, B, D]  VMEM block
    # pe_ref: [tS, 1, D]  VMEM block (broadcast over batch inside the kernel)
    # seed_ref: [1] int32 in SMEM
    y = x_ref[...].astype(jnp.float32) + pe_ref[...].astype(jnp.float32)

    if training and p > 0.0:
        shape = y.shape
        # Globally-unique per-element counter (independent of the tiling).
        s_off = (pl.program_id(0) * block_s).astype(jnp.uint32)
        s_idx = jax.lax.broadcasted_iota(jnp.int32, shape, 0).astype(jnp.uint32) + s_off
        b_idx = jax.lax.broadcasted_iota(jnp.int32, shape, 1).astype(jnp.uint32)
        d_idx = jax.lax.broadcasted_iota(jnp.int32, shape, 2).astype(jnp.uint32)
        lin = (s_idx * jnp.uint32(batch) + b_idx) * jnp.uint32(d_model) + d_idx

        # Counter-based hash PRNG ("lowbias32"): pure VPU integer ops, lowers on
        # TPU Mosaic and in interpret mode alike.  Rides free under the HBM bound.
        h = lin + seed_ref[0].astype(jnp.uint32) * jnp.uint32(0x9E3779B9)
        h = h ^ (h >> jnp.uint32(16))
        h = h * jnp.uint32(0x7FEB352D)
        h = h ^ (h >> jnp.uint32(15))
        h = h * jnp.uint32(0x846CA68B)
        h = h ^ (h >> jnp.uint32(16))

        # keep with probability (1 - p): h >= round(p * 2^32)
        threshold = jnp.uint32(min(0xFFFFFFFF, int(round(p * float(2 ** 32)))))
        keep = h >= threshold
        scale = jnp.float32(1.0 / (1.0 - p))
        y = jnp.where(keep, y * scale, jnp.zeros_like(y))

    o_ref[...] = y.astype(o_ref.dtype)


def make_positional_encoding_table(d_model, max_len=5000, dtype=jnp.float32):
    """Builds the [max_len, 1, d_model] sinusoidal table (same math as PyTorch)."""
    position = np.arange(0, max_len, dtype=np.float32)[:, None]            # [L, 1]
    div_term = np.exp(
        np.arange(0, d_model, 2, dtype=np.float32) * (-math.log(10000.0) / d_model)
    )                                                                      # [D/2]
    pe = np.zeros((max_len, d_model), dtype=np.float32)
    pe[:, 0::2] = np.sin(position * div_term)
    pe[:, 1::2] = np.cos(position * div_term)
    pe = pe[:, None, :]                                                    # [L, 1, D]
    return jnp.asarray(pe, dtype=dtype)


def positional_encoding(x, pe_table, *, dropout_p=0.1, training=True, seed=0,
                        target_block_bytes=4 * 1024 * 1024):
    """x: [S, B, D].  Returns [S, B, D] = dropout(x + pe[:S])."""
    S, B, D = x.shape
    pe_slice = pe_table[:S]                                                # [S, 1, D]
    seed_arr = jnp.asarray([seed], dtype=jnp.int32)

    # Sequence-axis tiling: largest tile with x-block <= ~4 MiB so that
    # 2 buffers x (x block + out block) + pe block fits comfortably in VMEM on
    # v5e/v6e (128 MiB) and v7x (64 MiB).
    bytes_per_row = B * D * np.dtype(x.dtype).itemsize
    tS = int(max(1, min(S, target_block_bytes // max(1, bytes_per_row))))
    if tS >= 8:
        tS = (tS // 8) * 8
    grid = (pl.cdiv(S, tS),)

    kernel = functools.partial(
        _pe_dropout_kernel,
        p=float(dropout_p), training=bool(training),
        block_s=int(tS), batch=int(B), d_model=int(D),
    )

    return pl.pallas_call(
        kernel,
        out_shape=jax.ShapeDtypeStruct((S, B, D), x.dtype),
        grid=grid,
        in_specs=[
            pl.BlockSpec(memory_space=pltpu.MemorySpace.SMEM),     # seed scalar
            pl.BlockSpec((tS, B, D), lambda i: (i, 0, 0)),         # x tile
            pl.BlockSpec((tS, 1, D), lambda i: (i, 0, 0)),         # pe tile
        ],
        out_specs=pl.BlockSpec((tS, B, D), lambda i: (i, 0, 0)),
        compiler_params=pltpu.CompilerParams(
            dimension_semantics=("parallel",),        # shard seq tiles across v7x's 2 TCs
            vmem_limit_bytes=48 * 1024 * 1024,        # headroom above scoped defaults
        ),
    )(seed_arr, x, pe_slice)


if __name__ == "__main__":
    # Small shapes consistent with the module: seq=8, batch=2, d_model=32.
    S, B, D = 8, 2, 32
    key = jax.random.PRNGKey(0)
    x = jax.random.normal(key, (S, B, D), dtype=jnp.float32)

    pe_table = make_positional_encoding_table(D, max_len=5000)

    # Training-mode forward (dropout active, p=0.1), matching nn.Module defaults.
    out_train = positional_encoding(x, pe_table, dropout_p=0.1, training=True, seed=0)
    out_train = jax.block_until_ready(out_train)

    # Eval-mode forward (dropout off) must equal x + pe exactly.
    out_eval = positional_encoding(x, pe_table, dropout_p=0.1, training=False)
    out_eval = jax.block_until_ready(out_eval)

    ref = np.asarray(x) + np.asarray(pe_table[:S])
    assert out_train.shape == (S, B, D)
    np.testing.assert_allclose(np.asarray(out_eval), ref, rtol=1e-6, atol=1e-6)

    # Training output: every element is either dropped (exactly 0) or ref/(1-p).
    ot = np.asarray(out_train)
    scaled = ref / (1.0 - 0.1)
    ok = (ot == 0.0) | np.isclose(ot, scaled, rtol=1e-5, atol=1e-6)
    assert bool(np.all(ok)), "dropout output is not {0, (x+pe)/(1-p)}"

    print("KERNEL_OK")
</pallas_src>

<mosaic_0001>
module attributes {stable_mosaic.version = 11 : i64} {
  func.func @_pe_dropout_kernel(%arg0: i32, %arg1: memref<1xi32, #tpu.memory_space<smem>>, %arg2: memref<8x2x32xf32, #tpu.memory_space<vmem>>, %arg3: memref<8x1x32xf32, #tpu.memory_space<vmem>>, %arg4: memref<8x2x32xf32, #tpu.memory_space<vmem>>) attributes {dimension_semantics = [#tpu.dimension_semantics<parallel>], iteration_bounds = array<i64: 1>, scalar_prefetch = 0 : i64, scratch_operands = 0 : i64, tpu.core_type = #tpu.core_type<tc>, window_params = [{transform_indices = @transform_0, window_bounds = array<i64: 1>}, {transform_indices = @transform_1, window_bounds = array<i64: 8, 2, 32>}, {transform_indices = @transform_2, window_bounds = array<i64: 8, 1, 32>}, {transform_indices = @transform_3, window_bounds = array<i64: 8, 2, 32>}]} {
    %c0 = arith.constant 0 : index
    %c0_0 = arith.constant 0 : index
    %c0_1 = arith.constant 0 : index
    %0 = vector.load %arg2[%c0, %c0_0, %c0_1] : memref<8x2x32xf32, #tpu.memory_space<vmem>>, vector<8x2x32xf32>
    %c0_2 = arith.constant 0 : index
    %c0_3 = arith.constant 0 : index
    %c0_4 = arith.constant 0 : index
    %1 = vector.load %arg3[%c0_2, %c0_3, %c0_4] : memref<8x1x32xf32, #tpu.memory_space<vmem>>, vector<8x1x32xf32>
    %2 = vector.broadcast %1 : vector<8x1x32xf32> to vector<8x2x32xf32>
    %3 = arith.addf %0, %2 : vector<8x2x32xf32>
    %c8_i32 = arith.constant 8 : i32
    %4 = arith.muli %arg0, %c8_i32 : i32
    %5 = tpu.iota {dimensions = array<i32: 0>} : vector<8x2x32xi32>
    %6 = vector.broadcast %4 : i32 to vector<8x2x32xi32>
    %7 = arith.addi %5, %6 : vector<8x2x32xi32>
    %8 = tpu.iota {dimensions = array<i32: 1>} : vector<8x2x32xi32>
    %9 = tpu.iota {dimensions = array<i32: 2>} : vector<8x2x32xi32>
    %c2_i32 = arith.constant 2 : i32
    %10 = vector.broadcast %c2_i32 : i32 to vector<8x2x32xi32>
    %11 = arith.muli %7, %10 : vector<8x2x32xi32>
    %12 = arith.addi %11, %8 : vector<8x2x32xi32>
    %c32_i32 = arith.constant 32 : i32
    %13 = vector.broadcast %c32_i32 : i32 to vector<8x2x32xi32>
    %14 = arith.muli %12, %13 : vector<8x2x32xi32>
    %15 = arith.addi %14, %9 : vector<8x2x32xi32>
    %c0_5 = arith.constant 0 : index
    %16 = memref.load %arg1[%c0_5] : memref<1xi32, #tpu.memory_space<smem>>
    %c-1640531527_i32 = arith.constant -1640531527 : i32
    %17 = arith.muli %16, %c-1640531527_i32 : i32
    %18 = vector.broadcast %17 : i32 to vector<8x2x32xi32>
    %19 = arith.addi %15, %18 : vector<8x2x32xi32>
    %c16_i32 = arith.constant 16 : i32
    %20 = vector.broadcast %c16_i32 : i32 to vector<8x2x32xi32>
    %21 = arith.shrui %19, %20 : vector<8x2x32xi32>
    %22 = arith.xori %19, %21 : vector<8x2x32xi32>
    %c2146121005_i32 = arith.constant 2146121005 : i32
    %23 = vector.broadcast %c2146121005_i32 : i32 to vector<8x2x32xi32>
    %24 = arith.muli %22, %23 : vector<8x2x32xi32>
    %c15_i32 = arith.constant 15 : i32
    %25 = vector.broadcast %c15_i32 : i32 to vector<8x2x32xi32>
    %26 = arith.shrui %24, %25 : vector<8x2x32xi32>
    %27 = arith.xori %24, %26 : vector<8x2x32xi32>
    %c-2073254261_i32 = arith.constant -2073254261 : i32
    %28 = vector.broadcast %c-2073254261_i32 : i32 to vector<8x2x32xi32>
    %29 = arith.muli %27, %28 : vector<8x2x32xi32>
    %c16_i32_6 = arith.constant 16 : i32
    %30 = vector.broadcast %c16_i32_6 : i32 to vector<8x2x32xi32>
    %31 = arith.shrui %29, %30 : vector<8x2x32xi32>
    %32 = arith.xori %29, %31 : vector<8x2x32xi32>
    %c429496730_i32 = arith.constant 429496730 : i32
    %33 = vector.broadcast %c429496730_i32 : i32 to vector<8x2x32xi32>
    %34 = arith.cmpi uge, %32, %33 : vector<8x2x32xi32>
    %cst = arith.constant 1.11111116 : f32
    %35 = vector.broadcast %cst : f32 to vector<8x2x32xf32>
    %36 = arith.mulf %3, %35 : vector<8x2x32xf32>
    %cst_7 = arith.constant 0.000000e+00 : f32
    %37 = vector.broadcast %cst_7 : f32 to vector<8x2x32xf32>
    %38 = arith.select %34, %36, %37 : vector<8x2x32xi1>, vector<8x2x32xf32>
    %c0_8 = arith.constant 0 : index
    %c0_9 = arith.constant 0 : index
    %c0_10 = arith.constant 0 : index
    %39 = vector.load %arg4[%c0_8, %c0_9, %c0_10] : memref<8x2x32xf32, #tpu.memory_space<vmem>>, vector<8x2x32xf32>
    tpu.vector_store %arg4[%c0_8, %c0_9, %c0_10], %38 {strides = array<i32>} : memref<8x2x32xf32, #tpu.memory_space<vmem>>, vector<8x2x32xf32>,
    return
  }
  func.func @transform_0(%arg0: i32) -> i32 {
    %c0_i32 = arith.constant 0 : i32
    %c0_i32_0 = arith.constant 0 : i32
    return %c0_i32 : i32
  }
  func.func @transform_1(%arg0: i32) -> (i32, i32, i32) {
    %c0_i32 = arith.constant 0 : i32
    %c0_i32_0 = arith.constant 0 : i32
    %c0_i32_1 = arith.constant 0 : i32
    return %arg0, %c0_i32, %c0_i32_0 : i32, i32, i32
  }
  func.func @transform_2(%arg0: i32) -> (i32, i32, i32) {
    %c0_i32 = arith.constant 0 : i32
    %c0_i32_0 = arith.constant 0 : i32
    %c0_i32_1 = arith.constant 0 : i32
    return %arg0, %c0_i32, %c0_i32_0 : i32, i32, i32
  }
  func.func @transform_3(%arg0: i32) -> (i32, i32, i32) {
    %c0_i32 = arith.constant 0 : i32
    %c0_i32_0 = arith.constant 0 : i32
    %c0_i32_1 = arith.constant 0 : i32
    return %arg0, %c0_i32, %c0_i32_0 : i32, i32, i32
  }
}

</mosaic_0001>

<llo_original>
// kernel: tpu_custom_call.1
$region0: #{tpu_custom_call.1}
  #allocation0 [shape = 'u32[]', space=smem, size = 0x4, offset = 0x4, fixed_abs, tag = 'smem constant byte address 0x4 - core index']
  #allocation1 [shape = 'u32[144,128]{1,0:T(1,128)}', space=vmem, size = 0x12000, scoped, tag = 'internal scratch']
  #allocation2 [shape = 's32[1]{0:T(128)S(6)}', space=smem, size = 0x200, scoped, tag = 'scoped memory for tpu_custom_call.1']
  %s0 = inlined_call_operand.<no memory space> [shape: s32[1], index: 0, kind: input, shape index: {}]
  %s1 = inlined_call_operand.hbm [shape: f32[8,2,32], index: 1, kind: input, shape index: {}]
  %s2 = inlined_call_operand.hbm [shape: f32[8,1,32], index: 2, kind: input, shape index: {}]
  %s3 = inlined_call_operand.hbm [shape: f32[8,2,32], index: 3, kind: output, shape index: {}]
  %s4 = sld [smem:[#allocation0]]
  $region30: #{tpu_custom_call.1} parent=0
    _
  %s6 = ssub.s32 1, %s4
  %s7 = scalar_select 0, %s6, %s4
  %8 = sst [smem:[#allocation2]] %s0
  $region1: #{tpu_custom_call.1} parent=0
    #allocation3 [shape = 'u8[8192]{0}', space=vmem, size = 0x2000, scoped, tag = 'input window, operand 1, single buffered']
    #allocation4 [shape = 's32[1]{0}', space=sflag, size = 0x4, scoped, tag = 'scoped memory for tpu_custom_call.1']
    #allocation5 [shape = 's32[1]{0}', space=sflag, size = 0x4, scoped, tag = 'scoped memory for tpu_custom_call.1']
    #allocation6 [shape = 'u8[4096]{0}', space=vmem, size = 0x1000, scoped, tag = 'input window, operand 2, single buffered']
    #allocation7 [shape = 's32[1]{0}', space=sflag, size = 0x4, scoped, tag = 'scoped memory for tpu_custom_call.1']
    #allocation8 [shape = 'u8[8192]{0}', space=vmem, size = 0x2000, scoped, tag = 'output window, operand 0, single buffered']
    %9 = vsyncpa [#allocation4], 0
    %10 = vsyncpa [#allocation7], 0
    %11 = vsyncpa [#allocation5], 0
    // Predicated region
    $region2: #{tpu_custom_call.1} parent=1 // pred_check
      _
    $region3: #{tpu_custom_call.1} parent=1 // pred_check_branch
      %13 = sbr.rel (0) target = $region5
    $region4: #{tpu_custom_call.1} parent=1 // pred_region
      _
    $region5: #{tpu_custom_call.1} parent=1 // pred_fallthru
      _
    // Predicated region
    $region6: #{tpu_custom_call.1} parent=1 // pred_check
      _
    $region7: #{tpu_custom_call.1} parent=1 // pred_check_branch
      %15 = sbr.rel (0) target = $region9
    $region8: #{tpu_custom_call.1} parent=1 // pred_region
      %s17 = ssub.s32 256, 256
      %18 = vsyncadd [#allocation4], %s17
      %s19 = sshll.u32 [#allocation3], 4
      %s20 = int_to_ptr.vmem [resolvable:$true] %s19
      %25 = dma.hbm_to_vmem [thread:$0]  %s1, 256, %s20, [#allocation4], 32, 32, 2
    $region9: #{tpu_custom_call.1} parent=1 // pred_fallthru
      _
    // Predicated region
    $region10: #{tpu_custom_call.1} parent=1 // pred_check
      _
    $region11: #{tpu_custom_call.1} parent=1 // pred_check_branch
      %27 = sbr.rel (0) target = $region13
    $region12: #{tpu_custom_call.1} parent=1 // pred_region
      %s29 = ssub.s32 128, 128
      %30 = vsyncadd [#allocation7], %s29
      %s31 = sshll.u32 [#allocation6], 4
      %s32 = int_to_ptr.vmem [resolvable:$true] %s31
      %37 = dma.hbm_to_vmem [thread:$0]  %s2, 128, %s32, [#allocation7], 16, 16, 1
    $region13: #{tpu_custom_call.1} parent=1 // pred_fallthru
      _
    // Predicated region
    $region14: #{tpu_custom_call.1} parent=1 // pred_check
      _
    $region15: #{tpu_custom_call.1} parent=1 // pred_check_branch
      %39 = sbr.rel (0) target = $region17
    $region16: #{tpu_custom_call.1} parent=1 // pred_region
      %40 = dma.done [#allocation4], 256
    $region17: #{tpu_custom_call.1} parent=1 // pred_fallthru
      _
    // Predicated region
    $region18: #{tpu_custom_call.1} parent=1 // pred_check
      _
    $region19: #{tpu_custom_call.1} parent=1 // pred_check_branch
      %42 = sbr.rel (0) target = $region21
    $region20: #{tpu_custom_call.1} parent=1 // pred_region
      %43 = dma.done [#allocation7], 128
    $region21: #{tpu_custom_call.1} parent=1 // pred_fallthru
      _
    %v44 = vld [vmem:[#allocation3] sm:$0x3]
    %v45 = vld [vmem:[#allocation3 + $0x2] sm:$0x3]
    %v46 = vld [vmem:[#allocation3 + $0x4] sm:$0x3]
    %v47 = vld [vmem:[#allocation3 + $0x6] sm:$0x3]
    %v48 = vld [vmem:[#allocation3 + $0x8] sm:$0x3]
    %v49 = vld [vmem:[#allocation3 + $0xa] sm:$0x3]
    %v50 = vld [vmem:[#allocation3 + $0xc] sm:$0x3]
    %v51 = vld [vmem:[#allocation3 + $0xe] sm:$0x3]
    %v52 = vld [vmem:[#allocation6] sm:$0x1]
    %v53 = vld [vmem:[#allocation6 + $0x1] sm:$0x1]
    %v54 = vld [vmem:[#allocation6 + $0x2] sm:$0x1]
    %v55 = vld [vmem:[#allocation6 + $0x3] sm:$0x1]
    %v56 = vld [vmem:[#allocation6 + $0x4] sm:$0x1]
    %v57 = vld [vmem:[#allocation6 + $0x5] sm:$0x1]
    %v58 = vld [vmem:[#allocation6 + $0x6] sm:$0x1]
    %v59 = vld [vmem:[#allocation6 + $0x7] sm:$0x1]
    %v68 = vlaneseq
    %v69 = vshrl.u32 %v68, 7
    %v70 = vsub.s32 0, %v69
    %v71 = vrot.slane %v52, %v70
    %v72 = vlaneseq
    %v73 = vshrl.u32 %v72, 7
    %v74 = vsub.s32 0, %v73
    %v75 = vrot.slane %v53, %v74
    %v76 = vlaneseq
    %v77 = vshrl.u32 %v76, 7
    %v78 = vsub.s32 0, %v77
    %v79 = vrot.slane %v54, %v78
    %v80 = vlaneseq
    %v81 = vshrl.u32 %v80, 7
    %v82 = vsub.s32 0, %v81
    %v83 = vrot.slane %v55, %v82
    %v84 = vlaneseq
    %v85 = vshrl.u32 %v84, 7
    %v86 = vsub.s32 0, %v85
    %v87 = vrot.slane %v56, %v86
    %v88 = vlaneseq
    %v89 = vshrl.u32 %v88, 7
    %v90 = vsub.s32 0, %v89
    %v91 = vrot.slane %v57, %v90
    %v92 = vlaneseq
    %v93 = vshrl.u32 %v92, 7
    %v94 = vsub.s32 0, %v93
    %v95 = vrot.slane %v58, %v94
    %v96 = vlaneseq
    %v97 = vshrl.u32 %v96, 7
    %v98 = vsub.s32 0, %v97
    %v99 = vrot.slane %v59, %v98
    %v108 = vadd.f32 %v44, %v71
    %v109 = vadd.f32 %v45, %v75
    %v110 = vadd.f32 %v46, %v79
    %v111 = vadd.f32 %v47, %v83
    %v112 = vadd.f32 %v48, %v87
    %v113 = vadd.f32 %v49, %v91
    %v114 = vadd.f32 %v50, %v95
    %v115 = vadd.f32 %v51, %v99
    %s116 = smul.u32 0, 8
    %v117 = vstv %s116
    %v118 = vadd.s32 %v117, 1
    %v119 = vadd.s32 %v117, 2
    %v120 = vadd.s32 %v117, 3
    %v121 = vadd.s32 %v117, 4
    %v122 = vadd.s32 %v117, 5
    %v123 = vadd.s32 %v117, 6
    %v124 = vadd.s32 %v117, 7
    %v125 = vlaneseq
    %v126 = vshrl.u32 %v125, 7
    %v127 = vlaneseq
    %v128 = vand.u32 %v127, 127
    %v129 = vmul.u32 %v117, 2
    %v130 = vmul.u32 %v118, 2
    %v131 = vmul.u32 %v119, 2
    %v132 = vmul.u32 %v120, 2
    %v133 = vmul.u32 %v121, 2
    %v134 = vmul.u32 %v122, 2
    %v135 = vmul.u32 %v123, 2
    %v136 = vmul.u32 %v124, 2
    %v137 = vadd.s32 %v129, %v126
    %v138 = vadd.s32 %v130, %v126
    %v139 = vadd.s32 %v131, %v126
    %v140 = vadd.s32 %v132, %v126
    %v141 = vadd.s32 %v133, %v126
    %v142 = vadd.s32 %v134, %v126
    %v143 = vadd.s32 %v135, %v126
    %v144 = vadd.s32 %v136, %v126
    %v145 = vmul.u32 %v137, 32
    %v146 = vmul.u32 %v138, 32
    %v147 = vmul.u32 %v139, 32
    %v148 = vmul.u32 %v140, 32
    %v149 = vmul.u32 %v141, 32
    %v150 = vmul.u32 %v142, 32
    %v151 = vmul.u32 %v143, 32
    %v152 = vmul.u32 %v144, 32
    %v153 = vadd.s32 %v145, %v128
    %v154 = vadd.s32 %v146, %v128
    %v155 = vadd.s32 %v147, %v128
    %v156 = vadd.s32 %v148, %v128
    %v157 = vadd.s32 %v149, %v128
    %v158 = vadd.s32 %v150, %v128
    %v159 = vadd.s32 %v151, %v128
    %v160 = vadd.s32 %v152, %v128
    %s161 = sld [smem:[#allocation2]]
    %s162 = smul.u32 %s161, 2654435769
    %v163 = vstv %s162
    %v164 = vadd.s32 %v153, %v163
    %v165 = vadd.s32 %v154, %v163
    %v166 = vadd.s32 %v155, %v163
    %v167 = vadd.s32 %v156, %v163
    %v168 = vadd.s32 %v157, %v163
    %v169 = vadd.s32 %v158, %v163
    %v170 = vadd.s32 %v159, %v163
    %v171 = vadd.s32 %v160, %v163
    %v172 = vshrl.u32 %v164, 16
    %v173 = vshrl.u32 %v165, 16
    %v174 = vshrl.u32 %v166, 16
    %v175 = vshrl.u32 %v167, 16
    %v176 = vshrl.u32 %v168, 16
    %v177 = vshrl.u32 %v169, 16
    %v178 = vshrl.u32 %v170, 16
    %v179 = vshrl.u32 %v171, 16
    %v180 = vxor.u32 %v164, %v172
    %v181 = vxor.u32 %v165, %v173
    %v182 = vxor.u32 %v166, %v174
    %v183 = vxor.u32 %v167, %v175
    %v184 = vxor.u32 %v168, %v176
    %v185 = vxor.u32 %v169, %v177
    %v186 = vxor.u32 %v170, %v178
    %v187 = vxor.u32 %v171, %v179
    %v188 = vmul.u32 %v180, 2146121005
    %v189 = vmul.u32 %v181, 2146121005
    %v190 = vmul.u32 %v182, 2146121005
    %v191 = vmul.u32 %v183, 2146121005
    %v192 = vmul.u32 %v184, 2146121005
    %v193 = vmul.u32 %v185, 2146121005
    %v194 = vmul.u32 %v186, 2146121005
    %v195 = vmul.u32 %v187, 2146121005
    %v196 = vshrl.u32 %v188, 15
    %v197 = vshrl.u32 %v189, 15
    %v198 = vshrl.u32 %v190, 15
    %v199 = vshrl.u32 %v191, 15
    %v200 = vshrl.u32 %v192, 15
    %v201 = vshrl.u32 %v193, 15
    %v202 = vshrl.u32 %v194, 15
    %v203 = vshrl.u32 %v195, 15
    %v204 = vxor.u32 %v188, %v196
    %v205 = vxor.u32 %v189, %v197
    %v206 = vxor.u32 %v190, %v198
    %v207 = vxor.u32 %v191, %v199
    %v208 = vxor.u32 %v192, %v200
    %v209 = vxor.u32 %v193, %v201
    %v210 = vxor.u32 %v194, %v202
    %v211 = vxor.u32 %v195, %v203
    %v212 = vmul.u32 %v204, 2221713035
    %v213 = vmul.u32 %v205, 2221713035
    %v214 = vmul.u32 %v206, 2221713035
    %v215 = vmul.u32 %v207, 2221713035
    %v216 = vmul.u32 %v208, 2221713035
    %v217 = vmul.u32 %v209, 2221713035
    %v218 = vmul.u32 %v210, 2221713035
    %v219 = vmul.u32 %v211, 2221713035
    %v220 = vshrl.u32 %v212, 16
    %v221 = vshrl.u32 %v213, 16
    %v222 = vshrl.u32 %v214, 16
    %v223 = vshrl.u32 %v215, 16
    %v224 = vshrl.u32 %v216, 16
    %v225 = vshrl.u32 %v217, 16
    %v226 = vshrl.u32 %v218, 16
    %v227 = vshrl.u32 %v219, 16
    %v228 = vxor.u32 %v212, %v220
    %v229 = vxor.u32 %v213, %v221
    %v230 = vxor.u32 %v214, %v222
    %v231 = vxor.u32 %v215, %v223
    %v232 = vxor.u32 %v216, %v224
    %v233 = vxor.u32 %v217, %v225
    %v234 = vxor.u32 %v218, %v226
    %v235 = vxor.u32 %v219, %v227
    %vm236 = vcmp.ge.u32.totalorder %v228, 429496730
    %vm237 = vcmp.ge.u32.totalorder %v229, 429496730
    %vm238 = vcmp.ge.u32.totalorder %v230, 429496730
    %vm239 = vcmp.ge.u32.totalorder %v231, 429496730
    %vm240 = vcmp.ge.u32.totalorder %v232, 429496730
    %vm241 = vcmp.ge.u32.totalorder %v233, 429496730
    %vm242 = vcmp.ge.u32.totalorder %v234, 429496730
    %vm243 = vcmp.ge.u32.totalorder %v235, 429496730
    %v244 = vmul.f32 %v108, 1.1111112
    %v245 = vmul.f32 %v109, 1.1111112
    %v246 = vmul.f32 %v110, 1.1111112
    %v247 = vmul.f32 %v111, 1.1111112
    %v248 = vmul.f32 %v112, 1.1111112
    %v249 = vmul.f32 %v113, 1.1111112
    %v250 = vmul.f32 %v114, 1.1111112
    %v251 = vmul.f32 %v115, 1.1111112
    %v252 = vsel %vm236, %v244, 0.0
    %v253 = vsel %vm237, %v245, 0.0
    %v254 = vsel %vm238, %v246, 0.0
    %v255 = vsel %vm239, %v247, 0.0
    %v256 = vsel %vm240, %v248, 0.0
    %v257 = vsel %vm241, %v249, 0.0
    %v258 = vsel %vm242, %v250, 0.0
    %v259 = vsel %vm243, %v251, 0.0
    %vm260 = vcmask 254976
    %261 = vst.msk [vmem:[#allocation8] sm:$0x3] %vm260, %v252
    %262 = vst.msk [vmem:[#allocation8 + $0x2] sm:$0x3] %vm260, %v253
    %263 = vst.msk [vmem:[#allocation8 + $0x4] sm:$0x3] %vm260, %v254
    %264 = vst.msk [vmem:[#allocation8 + $0x6] sm:$0x3] %vm260, %v255
    %265 = vst.msk [vmem:[#allocation8 + $0x8] sm:$0x3] %vm260, %v256
    %266 = vst.msk [vmem:[#allocation8 + $0xa] sm:$0x3] %vm260, %v257
    %267 = vst.msk [vmem:[#allocation8 + $0xc] sm:$0x3] %vm260, %v258
    %268 = vst.msk [vmem:[#allocation8 + $0xe] sm:$0x3] %vm260, %v259
    // Predicated region
    $region22: #{tpu_custom_call.1} parent=1 // pred_check
      _
    $region23: #{tpu_custom_call.1} parent=1 // pred_check_branch
      %270 = sbr.rel (0) target = $region25
    $region24: #{tpu_custom_call.1} parent=1 // pred_region
      %s272 = ssub.s32 256, 256
      %273 = vsyncadd [#allocation5], %s272
      %s274 = sshll.u32 [#allocation8], 4
      %s275 = int_to_ptr.vmem [resolvable:$true] %s274
      %280 = dma.vmem_to_hbm [thread:$0]  %s275, 256, %s3, [#allocation5], 32, 32, 2
    $region25: #{tpu_custom_call.1} parent=1 // pred_fallthru
      _
    // Predicated region
    $region26: #{tpu_custom_call.1} parent=1 // pred_check
      _
    $region27: #{tpu_custom_call.1} parent=1 // pred_check_branch
      %282 = sbr.rel (0) target = $region29
    $region28: #{tpu_custom_call.1} parent=1 // pred_region
      %283 = dma.done [#allocation5], 256
    $region29: #{tpu_custom_call.1} parent=1 // pred_fallthru
      _
    %284 = vsyncpa [#allocation4], 1
    %285 = vsyncpa [#allocation7], 1
    %286 = vsyncpa [#allocation5], 1

</llo_original>
